<compile_context>
chip_gen: v7x
topology: tpu7x:2x2x1
jax: 0.10.0
libtpu: 0.0.40
codegen_flags: <defaults>
</compile_context>

<pallas_src>
import functools

import jax
import jax.numpy as jnp
from jax.experimental import pallas as pl
from jax.experimental.pallas import tpu as pltpu


def _round_up(v, m):
    return (v + m - 1) // m * m


def mean_answer_kernel(rem, x_ref, off_ref, cnt_ref, emb_ref, wt_ref, b_ref,
                       o_ref, acc_ref):
    # x_ref:   [TN, H]   node-feature chunk k (only the leading rows are valid on
    #                    a ragged last chunk; the rest is undefined and never read)
    # off_ref: [B, 1]    int32 start node index of each graph   (resident)
    # cnt_ref: [B, 1]    int32 node count of each graph         (resident)
    # emb_ref: [B, H]    graph-level embedding to concat        (resident)
    # wt_ref:  [2H, C]   linear weight, transposed (PyTorch W is [C, 2H])
    # b_ref:   [1, C]    linear bias                            (resident)
    # o_ref:   [B, C]    output logits                          (written on last step)
    # acc_ref: [B, H]    f32 scratch accumulator of per-graph feature sums
    # rem:     static Python int, N % TN (0 -> every chunk is full)
    k = pl.program_id(0)
    nk = pl.num_programs(0)
    TN, H = x_ref.shape
    B = off_ref.shape[0]

    @pl.when(k == 0)
    def _():
        acc_ref[...] = jnp.zeros_like(acc_ref)

    off = off_ref[...]                      # [B, 1]
    end = off + cnt_ref[...]                # [B, 1] (computed once, reused)

    def accumulate(nrows):
        # Membership mask for node ids [k*TN, k*TN + nrows).
        node_ids = k * TN + jax.lax.broadcasted_iota(jnp.int32, (B, nrows), 1)
        member = (node_ids >= off) & (node_ids < end)        # [B, nrows] bool
        seg = member.astype(x_ref.dtype)    # pure 0/1 mask; no per-element divide
        # Per-graph feature sums for this chunk on the MXU (f32 accumulation).
        acc_ref[...] += jnp.dot(seg, x_ref[0:nrows, :],
                                preferred_element_type=jnp.float32)

    if rem == 0:
        accumulate(TN)
    else:
        # Ragged last chunk: restrict K to the rows that were actually DMA'd, so
        # the undefined tail of the VMEM block never enters the matmul.
        @pl.when(k < nk - 1)
        def _():
            accumulate(TN)

        @pl.when(k == nk - 1)
        def _():
            accumulate(rem)

    @pl.when(k == nk - 1)
    def _():
        # Scale sums -> means once on the small [B, H] result; guard empty graphs
        # (dgl.mean_nodes returns zeros for graphs with no nodes).
        cnt_f = cnt_ref[...].astype(jnp.float32)                 # [B, 1]
        inv = jnp.where(cnt_f > 0.0, 1.0 / jnp.maximum(cnt_f, 1.0), 0.0)
        means = acc_ref[...] * inv                               # [B, H] f32

        # Fused concat + linear:  cat([means, emb], 1) @ W^T + b
        w1 = wt_ref[0:H, :]                 # static slices: zero-cost views
        w2 = wt_ref[H:, :]
        out = (jnp.dot(means, w1, preferred_element_type=jnp.float32)
               + jnp.dot(emb_ref[...].astype(jnp.float32), w2,
                         preferred_element_type=jnp.float32)
               + b_ref[...])
        o_ref[...] = out.astype(o_ref.dtype)


def prepare_linear_params(W, b):
    """One-time conversion of PyTorch nn.Linear params.
    W: [C, 2H], b: [C]  ->  (wt: [2H, C] f32, b2: [1, C] f32)."""
    return jnp.asarray(W, jnp.float32).T, jnp.asarray(b, jnp.float32).reshape(1, -1)


def mean_answer_forward(x, offsets, counts, emb, wt, b2, *, node_tile=None):
    """x: [N, H] (f32 or bf16), offsets/counts: [B] i32, emb: [B, H],
       wt: [2H, C] f32 (pre-transposed, see prepare_linear_params), b2: [1, C] f32
       ->  [B, C] f32.  node_tile=None -> auto-sized node chunk."""
    N, H = x.shape
    B = offsets.shape[0]
    C = wt.shape[1]

    itemsize = jnp.dtype(x.dtype).itemsize
    sub = 8 if itemsize >= 4 else (16 if itemsize == 2 else 32)  # sublane granule
    lane_h = _round_up(H, 128)              # VMEM lane padding of the x block
    bytes_per_row = lane_h * itemsize

    # Node-chunk size, sized in padded bytes: ~8 MiB streamed payload per grid
    # step (amortizes per-step overhead), <=20 MiB per buffer so the double
    # buffer stays comfortably inside v7x's 64 MiB VMEM, rounded to 256 rows.
    max_rows = max(sub, (20 << 20) // bytes_per_row)
    if node_tile is None:
        tn = _round_up(max(256, (8 << 20) // bytes_per_row), 256)
    else:
        tn = _round_up(max(int(node_tile), sub), sub)
    tn = min(tn, _round_up(max(N, sub), sub), _round_up(max_rows, sub))
    grid = (pl.cdiv(N, tn),)
    rem = N % tn                            # static ragged-tail size (0 = none)

    off2 = offsets.reshape(B, 1).astype(jnp.int32)
    cnt2 = counts.reshape(B, 1).astype(jnp.int32)

    # VMEM budget hint: padded, double-buffered x block + residents + margin.
    b_pad = _round_up(B, 8)
    c_pad = _round_up(C, 128)
    x_block_bytes = 2 * tn * bytes_per_row
    resident_bytes = 2 * (b_pad * lane_h * jnp.dtype(emb.dtype).itemsize   # emb
                          + _round_up(2 * H, 8) * c_pad * 4                # W^T
                          + 8 * c_pad * 4                                  # bias
                          + b_pad * c_pad * 4                              # out
                          + 2 * b_pad * 128 * 4)                           # off/cnt
    acc_bytes = b_pad * lane_h * 4
    vmem_limit = int(min(max(x_block_bytes + resident_bytes + acc_bytes
                             + (2 << 20), 16 << 20), 64 << 20))

    cost = pl.CostEstimate(
        flops=2 * B * N * H + 4 * B * H * C,
        transcendentals=0,
        bytes_accessed=int(N * H * itemsize
                           + B * H * jnp.dtype(emb.dtype).itemsize
                           + 2 * H * C * 4 + C * 4 + B * C * 4 + 2 * B * 4))

    kernel = functools.partial(mean_answer_kernel, rem)
    return pl.pallas_call(
        kernel,
        out_shape=jax.ShapeDtypeStruct((B, C), jnp.float32),
        grid=grid,
        in_specs=[
            pl.BlockSpec((tn, H), lambda k: (k, 0)),        # x: streamed node chunks
            pl.BlockSpec((B, 1), lambda k: (0, 0)),         # offsets (resident)
            pl.BlockSpec((B, 1), lambda k: (0, 0)),         # counts  (resident)
            pl.BlockSpec((B, H), lambda k: (0, 0)),         # emb     (resident)
            pl.BlockSpec((2 * H, C), lambda k: (0, 0)),     # W^T     (resident)
            pl.BlockSpec((1, C), lambda k: (0, 0)),         # bias    (resident)
        ],
        out_specs=pl.BlockSpec((B, C), lambda k: (0, 0)),
        scratch_shapes=[pltpu.VMEM((B, H), jnp.float32)],
        compiler_params=pltpu.CompilerParams(
            dimension_semantics=("arbitrary",),
            vmem_limit_bytes=vmem_limit),
        cost_estimate=cost,
    )(x, off2, cnt2, emb, wt, b2)


if __name__ == "__main__":
    key = jax.random.PRNGKey(0)
    k1, k2, k3, k4 = jax.random.split(key, 4)

    hid_dim = 32
    num_class = 6
    # Ragged batched graph (B=5 graphs), including an empty graph (count==0 guard)
    # and a total node count N=27 that is NOT a multiple of the node tile, so the
    # ragged-last-chunk path is exercised.
    num_nodes = [5, 7, 0, 3, 12]
    B = len(num_nodes)
    N = sum(num_nodes)

    x = jax.random.normal(k1, (N, hid_dim), jnp.float32)        # node features 'h'
    emb = jax.random.normal(k2, (B, hid_dim), jnp.float32)      # graph-level emb

    # Deterministic nn.Linear(hid_dim*2, num_class) init (PyTorch-style bound).
    in_feat = hid_dim * 2
    bound = 1.0 / (in_feat ** 0.5)
    W = jax.random.uniform(k3, (num_class, in_feat), jnp.float32, -bound, bound)
    b = jax.random.uniform(k4, (num_class,), jnp.float32, -bound, bound)

    counts = jnp.array(num_nodes, jnp.int32)
    offsets = jnp.concatenate(
        [jnp.zeros((1,), jnp.int32), jnp.cumsum(counts)[:-1].astype(jnp.int32)])

    # Params prepared once (transpose hoisted out of the per-call path).
    wt, b2 = prepare_linear_params(W, b)

    # Pure-JAX reference for correctness.
    means_ref = []
    s = 0
    for c in num_nodes:
        if c == 0:
            means_ref.append(jnp.zeros((hid_dim,), jnp.float32))
        else:
            means_ref.append(x[s:s + c].mean(axis=0))
        s += c
    means_ref = jnp.stack(means_ref, axis=0)
    cat_ref = jnp.concatenate([means_ref, emb], axis=1)
    out_ref = cat_ref @ W.T + b

    # 1) Small tile: multi-chunk reduction + unaligned ragged last chunk (rem=3).
    out_small = mean_answer_forward(x, offsets, counts, emb, wt, b2, node_tile=8)
    out_small = jax.block_until_ready(out_small)
    assert jnp.allclose(out_small, out_ref, atol=1e-5, rtol=1e-5), (out_small, out_ref)
    assert not jnp.any(jnp.isnan(out_small)), out_small

    # 2) Auto-sized tile (production path; single chunk at this tiny N).
    out_auto = mean_answer_forward(x, offsets, counts, emb, wt, b2)
    out_auto = jax.block_until_ready(out_auto)
    assert jnp.allclose(out_auto, out_ref, atol=1e-5, rtol=1e-5), (out_auto, out_ref)
    assert not jnp.any(jnp.isnan(out_auto)), out_auto

    print("KERNEL_OK")
</pallas_src>

<mosaic_0001>
module attributes {stable_mosaic.version = 11 : i64} {
  func.func @mean_answer_kernel(%arg0: i32, %arg1: memref<8x32xf32, #tpu.memory_space<vmem>>, %arg2: memref<5x1xi32, #tpu.memory_space<vmem>>, %arg3: memref<5x1xi32, #tpu.memory_space<vmem>>, %arg4: memref<5x32xf32, #tpu.memory_space<vmem>>, %arg5: memref<64x6xf32, #tpu.memory_space<vmem>>, %arg6: memref<1x6xf32, #tpu.memory_space<vmem>>, %arg7: memref<5x6xf32, #tpu.memory_space<vmem>>, %arg8: memref<5x32xf32, #tpu.memory_space<vmem>>) attributes {dimension_semantics = [#tpu.dimension_semantics<arbitrary>], iteration_bounds = array<i64: 4>, scalar_prefetch = 0 : i64, scratch_operands = 1 : i64, tpu.core_type = #tpu.core_type<tc>, window_params = [{transform_indices = @transform_0, window_bounds = array<i64: 8, 32>}, {pipeline_mode = #tpu.pipeline_mode<synchronous>, transform_indices = @transform_1, window_bounds = array<i64: 5, 1>}, {pipeline_mode = #tpu.pipeline_mode<synchronous>, transform_indices = @transform_2, window_bounds = array<i64: 5, 1>}, {pipeline_mode = #tpu.pipeline_mode<synchronous>, transform_indices = @transform_3, window_bounds = array<i64: 5, 32>}, {pipeline_mode = #tpu.pipeline_mode<synchronous>, transform_indices = @transform_4, window_bounds = array<i64: 64, 6>}, {pipeline_mode = #tpu.pipeline_mode<synchronous>, transform_indices = @transform_5, window_bounds = array<i64: 1, 6>}, {pipeline_mode = #tpu.pipeline_mode<synchronous>, transform_indices = @transform_6, window_bounds = array<i64: 5, 6>}]} {
    %c0_i32 = arith.constant 0 : i32
    %0 = arith.cmpi eq, %arg0, %c0_i32 : i32
    %1 = arith.extui %0 : i1 to i32
    %c0_i32_0 = arith.constant 0 : i32
    %2 = arith.cmpi ne, %1, %c0_i32_0 : i32
    scf.if %2 {
      %cst = arith.constant 0.000000e+00 : f32
      %15 = vector.broadcast %cst : f32 to vector<5x32xf32>
      %c0_9 = arith.constant 0 : index
      %c0_10 = arith.constant 0 : index
      %16 = vector.load %arg8[%c0_9, %c0_10] : memref<5x32xf32, #tpu.memory_space<vmem>>, vector<5x32xf32>
      tpu.vector_store %arg8[%c0_9, %c0_10], %15 {strides = array<i32>} : memref<5x32xf32, #tpu.memory_space<vmem>>, vector<5x32xf32>,
    } else {
    }
    %c0 = arith.constant 0 : index
    %c0_1 = arith.constant 0 : index
    %3 = vector.load %arg2[%c0, %c0_1] : memref<5x1xi32, #tpu.memory_space<vmem>>, vector<5x1xi32>
    %c0_2 = arith.constant 0 : index
    %c0_3 = arith.constant 0 : index
    %4 = vector.load %arg3[%c0_2, %c0_3] : memref<5x1xi32, #tpu.memory_space<vmem>>, vector<5x1xi32>
    %5 = arith.addi %3, %4 : vector<5x1xi32>
    %c3_i32 = arith.constant 3 : i32
    %6 = arith.cmpi slt, %arg0, %c3_i32 : i32
    %7 = arith.extui %6 : i1 to i32
    %c0_i32_4 = arith.constant 0 : i32
    %8 = arith.cmpi ne, %7, %c0_i32_4 : i32
    scf.if %8 {
      %c8_i32 = arith.constant 8 : i32
      %15 = arith.muli %arg0, %c8_i32 : i32
      %16 = tpu.iota {dimensions = array<i32: 1>} : vector<5x8xi32>
      %17 = vector.broadcast %15 : i32 to vector<5x8xi32>
      %18 = arith.addi %17, %16 : vector<5x8xi32>
      %19 = vector.broadcast %3 : vector<5x1xi32> to vector<5x8xi32>
      %20 = arith.cmpi sge, %18, %19 : vector<5x8xi32>
      %21 = vector.broadcast %5 : vector<5x1xi32> to vector<5x8xi32>
      %22 = arith.cmpi slt, %18, %21 : vector<5x8xi32>
      %23 = arith.andi %20, %22 : vector<5x8xi1>
      %24 = arith.extui %23 : vector<5x8xi1> to vector<5x8xi32>
      %25 = arith.sitofp %24 : vector<5x8xi32> to vector<5x8xf32>
      %c0_9 = arith.constant 0 : index
      %c0_10 = arith.constant 0 : index
      %26 = vector.load %arg8[%c0_9, %c0_10] : memref<5x32xf32, #tpu.memory_space<vmem>>, vector<5x32xf32>
      %c0_11 = arith.constant 0 : index
      %c0_12 = arith.constant 0 : index
      %27 = vector.load %arg1[%c0_11, %c0_12] : memref<8x32xf32, #tpu.memory_space<vmem>>, vector<8x32xf32>
      %cst = arith.constant dense<0.000000e+00> : vector<5x32xf32>
      %28 = tpu.matmul %25, %27, %cst {dimension_numbers = #tpu.dot_dimension_numbers<[1], [0], [0], [1], [0, 0, 1, 1], [], []>} : vector<5x8xf32>, vector<8x32xf32>, vector<5x32xf32> -> vector<5x32xf32>
      %29 = arith.addf %26, %28 : vector<5x32xf32>
      %c0_13 = arith.constant 0 : index
      %c0_14 = arith.constant 0 : index
      %30 = vector.load %arg8[%c0_13, %c0_14] : memref<5x32xf32, #tpu.memory_space<vmem>>, vector<5x32xf32>
      tpu.vector_store %arg8[%c0_13, %c0_14], %29 {strides = array<i32>} : memref<5x32xf32, #tpu.memory_space<vmem>>, vector<5x32xf32>,
    } else {
    }
    %c3_i32_5 = arith.constant 3 : i32
    %9 = arith.cmpi eq, %arg0, %c3_i32_5 : i32
    %10 = arith.extui %9 : i1 to i32
    %c0_i32_6 = arith.constant 0 : i32
    %11 = arith.cmpi ne, %10, %c0_i32_6 : i32
    scf.if %11 {
      %c8_i32 = arith.constant 8 : i32
      %15 = arith.muli %arg0, %c8_i32 : i32
      %16 = tpu.iota {dimensions = array<i32: 1>} : vector<5x3xi32>
      %17 = vector.broadcast %15 : i32 to vector<5x3xi32>
      %18 = arith.addi %17, %16 : vector<5x3xi32>
      %19 = vector.broadcast %3 : vector<5x1xi32> to vector<5x3xi32>
      %20 = arith.cmpi sge, %18, %19 : vector<5x3xi32>
      %21 = vector.broadcast %5 : vector<5x1xi32> to vector<5x3xi32>
      %22 = arith.cmpi slt, %18, %21 : vector<5x3xi32>
      %23 = arith.andi %20, %22 : vector<5x3xi1>
      %24 = arith.extui %23 : vector<5x3xi1> to vector<5x3xi32>
      %25 = arith.sitofp %24 : vector<5x3xi32> to vector<5x3xf32>
      %c0_9 = arith.constant 0 : index
      %c0_10 = arith.constant 0 : index
      %26 = vector.load %arg8[%c0_9, %c0_10] : memref<5x32xf32, #tpu.memory_space<vmem>>, vector<5x32xf32>
      %c0_11 = arith.constant 0 : index
      %c0_12 = arith.constant 0 : index
      %27 = vector.load %arg1[%c0_11, %c0_12] : memref<8x32xf32, #tpu.memory_space<vmem>>, vector<3x32xf32>
      %cst = arith.constant dense<0.000000e+00> : vector<5x32xf32>
      %28 = tpu.matmul %25, %27, %cst {dimension_numbers = #tpu.dot_dimension_numbers<[1], [0], [0], [1], [0, 0, 1, 1], [], []>} : vector<5x3xf32>, vector<3x32xf32>, vector<5x32xf32> -> vector<5x32xf32>
      %29 = arith.addf %26, %28 : vector<5x32xf32>
      %c0_13 = arith.constant 0 : index
      %c0_14 = arith.constant 0 : index
      %30 = vector.load %arg8[%c0_13, %c0_14] : memref<5x32xf32, #tpu.memory_space<vmem>>, vector<5x32xf32>
      tpu.vector_store %arg8[%c0_13, %c0_14], %29 {strides = array<i32>} : memref<5x32xf32, #tpu.memory_space<vmem>>, vector<5x32xf32>,
    } else {
    }
    %c3_i32_7 = arith.constant 3 : i32
    %12 = arith.cmpi eq, %arg0, %c3_i32_7 : i32
    %13 = arith.extui %12 : i1 to i32
    %c0_i32_8 = arith.constant 0 : i32
    %14 = arith.cmpi ne, %13, %c0_i32_8 : i32
    scf.if %14 {
      %c0_9 = arith.constant 0 : index
      %c0_10 = arith.constant 0 : index
      %15 = vector.load %arg3[%c0_9, %c0_10] : memref<5x1xi32, #tpu.memory_space<vmem>>, vector<5x1xi32>
      %16 = arith.sitofp %15 : vector<5x1xi32> to vector<5x1xf32>
      %cst = arith.constant 0.000000e+00 : f32
      %17 = vector.broadcast %cst : f32 to vector<5x1xf32>
      %18 = arith.cmpf ogt, %16, %17 : vector<5x1xf32>
      %cst_11 = arith.constant 1.000000e+00 : f32
      %19 = vector.broadcast %cst_11 : f32 to vector<5x1xf32>
      %20 = arith.maximumf %16, %19 : vector<5x1xf32>
      %cst_12 = arith.constant 1.000000e+00 : f32
      %21 = vector.broadcast %cst_12 : f32 to vector<5x1xf32>
      %22 = arith.divf %21, %20 : vector<5x1xf32>
      %cst_13 = arith.constant 0.000000e+00 : f32
      %23 = vector.broadcast %cst_13 : f32 to vector<5x1xf32>
      %24 = arith.select %18, %22, %23 : vector<5x1xi1>, vector<5x1xf32>
      %c0_14 = arith.constant 0 : index
      %c0_15 = arith.constant 0 : index
      %25 = vector.load %arg8[%c0_14, %c0_15] : memref<5x32xf32, #tpu.memory_space<vmem>>, vector<5x32xf32>
      %26 = vector.broadcast %24 : vector<5x1xf32> to vector<5x32xf32>
      %27 = arith.mulf %25, %26 : vector<5x32xf32>
      %c0_16 = arith.constant 0 : index
      %c0_17 = arith.constant 0 : index
      %28 = vector.load %arg5[%c0_16, %c0_17] : memref<64x6xf32, #tpu.memory_space<vmem>>, vector<32x6xf32>
      %c32 = arith.constant 32 : index
      %c0_18 = arith.constant 0 : index
      %29 = vector.load %arg5[%c32, %c0_18] : memref<64x6xf32, #tpu.memory_space<vmem>>, vector<32x6xf32>
      %cst_19 = arith.constant dense<0.000000e+00> : vector<5x6xf32>
      %30 = tpu.matmul %27, %28, %cst_19 {dimension_numbers = #tpu.dot_dimension_numbers<[1], [0], [0], [1], [0, 0, 1, 1], [], []>} : vector<5x32xf32>, vector<32x6xf32>, vector<5x6xf32> -> vector<5x6xf32>
      %c0_20 = arith.constant 0 : index
      %c0_21 = arith.constant 0 : index
      %31 = vector.load %arg4[%c0_20, %c0_21] : memref<5x32xf32, #tpu.memory_space<vmem>>, vector<5x32xf32>
      %cst_22 = arith.constant dense<0.000000e+00> : vector<5x6xf32>
      %32 = tpu.matmul %31, %29, %cst_22 {dimension_numbers = #tpu.dot_dimension_numbers<[1], [0], [0], [1], [0, 0, 1, 1], [], []>} : vector<5x32xf32>, vector<32x6xf32>, vector<5x6xf32> -> vector<5x6xf32>
      %33 = arith.addf %30, %32 : vector<5x6xf32>
      %c0_23 = arith.constant 0 : index
      %c0_24 = arith.constant 0 : index
      %34 = vector.load %arg6[%c0_23, %c0_24] : memref<1x6xf32, #tpu.memory_space<vmem>>, vector<1x6xf32>
      %35 = vector.broadcast %34 : vector<1x6xf32> to vector<5x6xf32>
      %36 = arith.addf %33, %35 : vector<5x6xf32>
      %c0_25 = arith.constant 0 : index
      %c0_26 = arith.constant 0 : index
      %37 = vector.load %arg7[%c0_25, %c0_26] : memref<5x6xf32, #tpu.memory_space<vmem>>, vector<5x6xf32>
      tpu.vector_store %arg7[%c0_25, %c0_26], %36 {strides = array<i32>} : memref<5x6xf32, #tpu.memory_space<vmem>>, vector<5x6xf32>,
    } else {
    }
    return
  }
  func.func @transform_0(%arg0: i32) -> (i32, i32) {
    %c0_i32 = arith.constant 0 : i32
    %c0_i32_0 = arith.constant 0 : i32
    return %arg0, %c0_i32 : i32, i32
  }
  func.func @transform_1(%arg0: i32) -> (i32, i32) {
    %c0_i32 = arith.constant 0 : i32
    %c0_i32_0 = arith.constant 0 : i32
    %c0_i32_1 = arith.constant 0 : i32
    return %c0_i32, %c0_i32_0 : i32, i32
  }
  func.func @transform_2(%arg0: i32) -> (i32, i32) {
    %c0_i32 = arith.constant 0 : i32
    %c0_i32_0 = arith.constant 0 : i32
    %c0_i32_1 = arith.constant 0 : i32
    return %c0_i32, %c0_i32_0 : i32, i32
  }
  func.func @transform_3(%arg0: i32) -> (i32, i32) {
    %c0_i32 = arith.constant 0 : i32
    %c0_i32_0 = arith.constant 0 : i32
    %c0_i32_1 = arith.constant 0 : i32
    return %c0_i32, %c0_i32_0 : i32, i32
  }
  func.func @transform_4(%arg0: i32) -> (i32, i32) {
    %c0_i32 = arith.constant 0 : i32
    %c0_i32_0 = arith.constant 0 : i32
    %c0_i32_1 = arith.constant 0 : i32
    return %c0_i32, %c0_i32_0 : i32, i32
  }
  func.func @transform_5(%arg0: i32) -> (i32, i32) {
    %c0_i32 = arith.constant 0 : i32
    %c0_i32_0 = arith.constant 0 : i32
    %c0_i32_1 = arith.constant 0 : i32
    return %c0_i32, %c0_i32_0 : i32, i32
  }
  func.func @transform_6(%arg0: i32) -> (i32, i32) {
    %c0_i32 = arith.constant 0 : i32
    %c0_i32_0 = arith.constant 0 : i32
    %c0_i32_1 = arith.constant 0 : i32
    return %c0_i32, %c0_i32_0 : i32, i32
  }
}

</mosaic_0001>

<llo_original>
// kernel: tpu_custom_call.1
$region0: #{tpu_custom_call.1}
  #allocation0 [shape = 'u32[]', space=smem, size = 0x4, offset = 0x4, fixed_abs, tag = 'smem constant byte address 0x4 - core index']
  #allocation1 [shape = 'u32[144,128]{1,0:T(1,128)}', space=vmem, size = 0x12000, scoped, tag = 'internal scratch']
  #allocation2 [shape = 'f32[5,32]{1,0:T(8,128)}', space=vmem, size = 0x1000, scoped, tag = 'scratch operand']
  %s0 = inlined_call_operand.vmem [shape: f32[27,32], index: 0, kind: input, shape index: {}]
  %s1 = inlined_call_operand.vmem [shape: s32[5,1], index: 1, kind: input, shape index: {}]
  %s2 = inlined_call_operand.vmem [shape: s32[5,1], index: 2, kind: input, shape index: {}]
  %s3 = inlined_call_operand.vmem [shape: f32[5,32], index: 3, kind: input, shape index: {}]
  %s4 = inlined_call_operand.vmem [shape: f32[64,6], index: 4, kind: input, shape index: {}]
  %s5 = inlined_call_operand.vmem [shape: f32[1,6], index: 5, kind: input, shape index: {}]
  %s6 = inlined_call_operand.hbm [shape: f32[5,6], index: 6, kind: output, shape index: {}]
  %s7 = sld [smem:[#allocation0]]
  $region69: #{tpu_custom_call.1} parent=0
    _
  %s9 = ssub.s32 1, %s7
  %s10 = scalar_select 0, %s9, %s7
  $region1: #{tpu_custom_call.1} parent=0
    #allocation3 [shape = 'u8[4096]{0}', space=vmem, size = 0x1000, scoped, tag = 'output window, operand 0, single buffered']
    #allocation4 [shape = 's32[2]{0}', space=sflag, size = 0x8, scoped, tag = 'scoped memory for tpu_custom_call.1']
    %11 = vsyncpa [#allocation4], 0
    loop: start=0, step=1, limit=6
    $region2: #{tpu_custom_call.1} parent=1 // loop_pre_header
      _
    $region3: #{tpu_custom_call.1} parent=1 // loop_header
      %s13 = sphi 0, %s17
      %p14 = scmp.ge.s32.totalorder %s13, 6
      %s23 = sphi 0, %s25
      %s26 = sphi 0, %s23
      %s27 = sphi 0, %s26
      %s43 = sphi 0, %s27
      %s47 = sphi 0, %s47
      %s49 = sphi 0, %s47
      %s50 = sphi 0, %s49
      %s64 = sphi 0, %s50
      %s68 = sphi 0, %s68
      %s70 = sphi 0, %s68
      %s71 = sphi 0, %s70
      %s85 = sphi 0, %s71
      %s89 = sphi 0, %s89
      %s91 = sphi 0, %s89
      %s92 = sphi 0, %s91
      %s106 = sphi 0, %s92
      %s110 = sphi 0, %s110
      %s112 = sphi 0, %s110
      %s113 = sphi 0, %s112
      %s127 = sphi 0, %s113
      %s131 = sphi 0, %s131
      %s133 = sphi 0, %s131
      %s134 = sphi 0, %s133
      %s148 = sphi 0, %s134
      %s152 = sphi 0, %s152
      %s154 = sphi 0, %s152
      %s155 = sphi 0, %s154
      %s169 = sphi 0, %s155
    $region4: #{tpu_custom_call.1} parent=1 // loop_header_branch
      %16 = sbr.rel (%p14) target = $region8
    $region5: #{tpu_custom_call.1} parent=1 // loop_body
      %s18 = ssub.s32 %s13, 1
      %s19 = ssub.s32 %s13, 2
      %s20 = sadd.s32 %s13, 1
      %s21 = ssub.s32 %s13, %s20
      %p22 = scmp.eq.s32.totalorder %s21, 0
      %s24 = sadd.s32 %s23, 1
      %s25 = scalar_select %p22, %s23, %s24
      %p28 = pneg %p22
      %p29 = scmp.eq.s32.totalorder %s13, 3
      %p30 = por %p28, %p29
      %p31 = scmp.ne.s32.totalorder %s23, %s26
      %p32 = scmp.eq.s32.totalorder %s13, 0
      %p33 = por %p31, %p32
      %p34 = scmp.ne.s32.totalorder %s23, %s26
      %p35 = scmp.eq.s32.totalorder %s18, 3
      %p36 = por %p34, %p35
      %p37 = scmp.ne.s32.totalorder %s26, %s27
      %p38 = scmp.eq.s32.totalorder %s18, 0
      %p39 = por %p37, %p38
      %p40 = scmp.ne.s32.totalorder %s26, %s27
      %p41 = scmp.eq.s32.totalorder %s19, 3
      %p42 = por %p40, %p41
      %p44 = scmp.ne.s32.totalorder %s27, %s43
      %p45 = scmp.eq.s32.totalorder %s19, 0
      %p46 = por %p44, %p45
      %s48 = sadd.s32 %s47, 1
      %p51 = scmp.eq.s32.totalorder %s13, 3
      %p52 = scmp.ne.s32.totalorder %s47, %s49
      %p53 = scmp.eq.s32.totalorder %s13, 0
      %p54 = por %p52, %p53
      %p55 = scmp.ne.s32.totalorder %s47, %s49
      %p56 = scmp.eq.s32.totalorder %s18, 3
      %p57 = por %p55, %p56
      %p58 = scmp.ne.s32.totalorder %s49, %s50
      %p59 = scmp.eq.s32.totalorder %s18, 0
      %p60 = por %p58, %p59
      %p61 = scmp.ne.s32.totalorder %s49, %s50
      %p62 = scmp.eq.s32.totalorder %s19, 3
      %p63 = por %p61, %p62
      %p65 = scmp.ne.s32.totalorder %s50, %s64
      %p66 = scmp.eq.s32.totalorder %s19, 0
      %p67 = por %p65, %p66
      %s69 = sadd.s32 %s68, 1
      %p72 = scmp.eq.s32.totalorder %s13, 3
      %p73 = scmp.ne.s32.totalorder %s68, %s70
      %p74 = scmp.eq.s32.totalorder %s13, 0
      %p75 = por %p73, %p74
      %p76 = scmp.ne.s32.totalorder %s68, %s70
      %p77 = scmp.eq.s32.totalorder %s18, 3
      %p78 = por %p76, %p77
      %p79 = scmp.ne.s32.totalorder %s70, %s71
      %p80 = scmp.eq.s32.totalorder %s18, 0
      %p81 = por %p79, %p80
      %p82 = scmp.ne.s32.totalorder %s70, %s71
      %p83 = scmp.eq.s32.totalorder %s19, 3
      %p84 = por %p82, %p83
      %p86 = scmp.ne.s32.totalorder %s71, %s85
      %p87 = scmp.eq.s32.totalorder %s19, 0
      %p88 = por %p86, %p87
      %s90 = sadd.s32 %s89, 1
      %p93 = scmp.eq.s32.totalorder %s13, 3
      %p94 = scmp.ne.s32.totalorder %s89, %s91
      %p95 = scmp.eq.s32.totalorder %s13, 0
      %p96 = por %p94, %p95
      %p97 = scmp.ne.s32.totalorder %s89, %s91
      %p98 = scmp.eq.s32.totalorder %s18, 3
      %p99 = por %p97, %p98
      %p100 = scmp.ne.s32.totalorder %s91, %s92
      %p101 = scmp.eq.s32.totalorder %s18, 0
      %p102 = por %p100, %p101
      %p103 = scmp.ne.s32.totalorder %s91, %s92
      %p104 = scmp.eq.s32.totalorder %s19, 3
      %p105 = por %p103, %p104
      %p107 = scmp.ne.s32.totalorder %s92, %s106
      %p108 = scmp.eq.s32.totalorder %s19, 0
      %p109 = por %p107, %p108
      %s111 = sadd.s32 %s110, 1
      %p114 = scmp.eq.s32.totalorder %s13, 3
      %p115 = scmp.ne.s32.totalorder %s110, %s112
      %p116 = scmp.eq.s32.totalorder %s13, 0
      %p117 = por %p115, %p116
      %p118 = scmp.ne.s32.totalorder %s110, %s112
      %p119 = scmp.eq.s32.totalorder %s18, 3
      %p120 = por %p118, %p119
      %p121 = scmp.ne.s32.totalorder %s112, %s113
      %p122 = scmp.eq.s32.totalorder %s18, 0
      %p123 = por %p121, %p122
      %p124 = scmp.ne.s32.totalorder %s112, %s113
      %p125 = scmp.eq.s32.totalorder %s19, 3
      %p126 = por %p124, %p125
      %p128 = scmp.ne.s32.totalorder %s113, %s127
      %p129 = scmp.eq.s32.totalorder %s19, 0
      %p130 = por %p128, %p129
      %s132 = sadd.s32 %s131, 1
      %p135 = scmp.eq.s32.totalorder %s13, 3
      %p136 = scmp.ne.s32.totalorder %s131, %s133
      %p137 = scmp.eq.s32.totalorder %s13, 0
      %p138 = por %p136, %p137
      %p139 = scmp.ne.s32.totalorder %s131, %s133
      %p140 = scmp.eq.s32.totalorder %s18, 3
      %p141 = por %p139, %p140
      %p142 = scmp.ne.s32.totalorder %s133, %s134
      %p143 = scmp.eq.s32.totalorder %s18, 0
      %p144 = por %p142, %p143
      %p145 = scmp.ne.s32.totalorder %s133, %s134
      %p146 = scmp.eq.s32.totalorder %s19, 3
      %p147 = por %p145, %p146
      %p149 = scmp.ne.s32.totalorder %s134, %s148
      %p150 = scmp.eq.s32.totalorder %s19, 0
      %p151 = por %p149, %p150
      %s153 = sadd.s32 %s152, 1
      %p156 = scmp.eq.s32.totalorder %s13, 3
      %p157 = scmp.ne.s32.totalorder %s152, %s154
      %p158 = scmp.eq.s32.totalorder %s13, 0
      %p159 = por %p157, %p158
      %p160 = scmp.ne.s32.totalorder %s152, %s154
      %p161 = scmp.eq.s32.totalorder %s18, 3
      %p162 = por %p160, %p161
      %p163 = scmp.ne.s32.totalorder %s154, %s155
      %p164 = scmp.eq.s32.totalorder %s18, 0
      %p165 = por %p163, %p164
      %p166 = scmp.ne.s32.totalorder %s154, %s155
      %p167 = scmp.eq.s32.totalorder %s19, 3
      %p168 = por %p166, %p167
      %p170 = scmp.ne.s32.totalorder %s155, %s169
      %p171 = scmp.eq.s32.totalorder %s19, 0
      %p172 = por %p170, %p171
      %p173 = scmp.le.s32.totalorder 1, %s13
      %p174 = scmp.lt.s32.totalorder %s13, 5
      %p175 = pnand %p173, %p174
      %p176 = pneg %p175
      // Predicated region
      $region9: #{tpu_custom_call.1} parent=5 // pred_check
        _
      $region10: #{tpu_custom_call.1} parent=5 // pred_check_branch
        %178 = sbr.rel (%p175) target = $region12
      $region11: #{tpu_custom_call.1} parent=5 // pred_region
        %s179 = ssub.s32 %s13, 1
        // Predicated region
        $region13: #{tpu_custom_call.1} parent=11 // pred_check
          %p180 = pneg %p60
        $region14: #{tpu_custom_call.1} parent=11 // pred_check_branch
          %182 = sbr.rel (%p180) target = $region16
        $region15: #{tpu_custom_call.1} parent=11 // pred_region
          _
        $region16: #{tpu_custom_call.1} parent=11 // pred_fallthru
          _
        // Predicated region
        $region17: #{tpu_custom_call.1} parent=11 // pred_check
          %p183 = pneg %p81
        $region18: #{tpu_custom_call.1} parent=11 // pred_check_branch
          %185 = sbr.rel (%p183) target = $region20
        $region19: #{tpu_custom_call.1} parent=11 // pred_region
          _
        $region20: #{tpu_custom_call.1} parent=11 // pred_fallthru
          _
        // Predicated region
        $region21: #{tpu_custom_call.1} parent=11 // pred_check
          %p186 = pneg %p102
        $region22: #{tpu_custom_call.1} parent=11 // pred_check_branch
          %188 = sbr.rel (%p186) target = $region24
        $region23: #{tpu_custom_call.1} parent=11 // pred_region
          _
        $region24: #{tpu_custom_call.1} parent=11 // pred_fallthru
          _
        // Predicated region
        $region25: #{tpu_custom_call.1} parent=11 // pred_check
          %p189 = pneg %p123
        $region26: #{tpu_custom_call.1} parent=11 // pred_check_branch
          %191 = sbr.rel (%p189) target = $region28
        $region27: #{tpu_custom_call.1} parent=11 // pred_region
          _
        $region28: #{tpu_custom_call.1} parent=11 // pred_fallthru
          _
        // Predicated region
        $region29: #{tpu_custom_call.1} parent=11 // pred_check
          %p192 = pneg %p144
        $region30: #{tpu_custom_call.1} parent=11 // pred_check_branch
          %194 = sbr.rel (%p192) target = $region32
        $region31: #{tpu_custom_call.1} parent=11 // pred_region
          _
        $region32: #{tpu_custom_call.1} parent=11 // pred_fallthru
          _
      $region12: #{tpu_custom_call.1} parent=5 // pred_fallthru
        _
      %p195 = scmp.lt.s32.totalorder %s13, 4
      // Predicated region
      $region33: #{tpu_custom_call.1} parent=5 // pred_check
        %p196 = pneg %p195
      $region34: #{tpu_custom_call.1} parent=5 // pred_check_branch
        %198 = sbr.rel (%p196) target = $region36
      $region35: #{tpu_custom_call.1} parent=5 // pred_region
        // Predicated region
        $region37: #{tpu_custom_call.1} parent=35 // pred_check
          %p199 = pneg %p33
        $region38: #{tpu_custom_call.1} parent=35 // pred_check_branch
          %201 = sbr.rel (%p199) target = $region40
        $region39: #{tpu_custom_call.1} parent=35 // pred_region
          %p202 = scmp.lt.s32.totalorder %s13, 3
          %s203 = scalar_select %p202, %s13, 3
          %s204 = smul.addr %s203, 8
          %s205 = scalar_lea.vmem %s0, %s204
        $region40: #{tpu_custom_call.1} parent=35 // pred_fallthru
          _
      $region36: #{tpu_custom_call.1} parent=5 // pred_fallthru
        _
      %p206 = scmp.le.s32.totalorder 1, %s13
      %p207 = scmp.lt.s32.totalorder %s13, 5
      %p208 = pnand %p206, %p207
      %p209 = pneg %p208
      // Predicated region
      $region41: #{tpu_custom_call.1} parent=5 // pred_check
        _
      $region42: #{tpu_custom_call.1} parent=5 // pred_check_branch
        %211 = sbr.rel (%p208) target = $region44
      $region43: #{tpu_custom_call.1} parent=5 // pred_region
        %s212 = ssub.s32 %s13, 1
        %p213 = scmp.lt.s32.totalorder %s18, 3
        %s214 = scalar_select %p213, %s18, 3
        %s215 = smul.addr %s214, 8
        %s216 = scalar_lea.vmem %s0, %s215
        %p217 = pneg %p39
        %p218 = pneg %p36
        %p219 = pneg %p60
        %p220 = pneg %p57
        %p221 = pneg %p81
        %p222 = pneg %p78
        %p223 = pneg %p102
        %p224 = pneg %p99
        %p225 = pneg %p123
        %p226 = pneg %p120
        %p227 = pneg %p144
        %p228 = pneg %p141
        %p229 = pneg %p165
        %p230 = pneg %p162
        %p231 = scmp.lt.s32.totalorder %s18, 3
        %s232 = scalar_select %p231, %s18, 3
        %s233 = smul.addr %s232, 8
        %s234 = scalar_lea.vmem %s0, %s233
        %p235 = scmp.eq.s32.totalorder %s18, 0
        // Predicated region
        $region45: #{tpu_custom_call.1} parent=43 // pred_check
          %p236 = pneg %p235
        $region46: #{tpu_custom_call.1} parent=43 // pred_check_branch
          %238 = sbr.rel (%p236) target = $region48
        $region47: #{tpu_custom_call.1} parent=43 // pred_region
          %vm239 = vcmask 258048
          %240 = vst.msk [vmem:[#allocation2] sm:$0x1f] %vm239, 0.0
        $region48: #{tpu_custom_call.1} parent=43 // pred_fallthru
          _
        %v241 = vld [vmem:[%s1] sm:$0x1f]
        %v242 = vld [vmem:[%s2] sm:$0x1f]
        %v243 = vadd.s32 %v241, %v242
        %p244 = scmp.lt.s32.totalorder %s18, 3
        // Predicated region
        $region49: #{tpu_custom_call.1} parent=43 // pred_check
          %p245 = pneg %p244
        $region50: #{tpu_custom_call.1} parent=43 // pred_check_branch
          %247 = sbr.rel (%p245) target = $region52
        $region51: #{tpu_custom_call.1} parent=43 // pred_region
          %s248 = smul.u32 %s18, 8
          %v249 = vlaneseq
          %v250 = vand.u32 %v249, 127
          %v251 = vstv %s248
          %v252 = vadd.s32 %v251, %v250
          %253 = vset.pattern.permute.xlu0 0
          %254 = vperm.xlu0 %253, %v241
          %v255 = vpop.permute.xlu0 %254
          %vm256 = vcmp.ge.s32.totalorder %v252, %v255
          %257 = vset.pattern.permute.xlu0 0
          %258 = vperm.xlu0 %257, %v243
          %v259 = vpop.permute.xlu0 %258
          %vm260 = vcmp.lt.s32.totalorder %v252, %v259
          %vm261 = vmand %vm256, %vm260
          %v262 = vsel %vm261, 1, 0
          %v263 = vcvt.s32.f32 %v262
          %v264 = vld [vmem:[#allocation2] sm:$0x1f]
          %v265 = vld [vmem:[%s234] sm:$0xff]
          %vm266 = vcmask 64512
          %v268 = vsel %vm266, %v263, 0
          %270 = vmatprep.subr.mxu0 0.0
          %271 = vmatpush1.msra.mxu0 %v265
          %272 = vmatprep.subr.mxu0 0.0
          %273 = vmatpush1.msra.mxu0 0.0
          %274 = vmatprep.subr.mxu0 0.0
          %275 = vmatpush1.msra.mxu0 0.0
          %276 = vmatprep.subr.mxu0 0.0
          %277 = vmatpush1.msra.mxu0 0.0
          %278 = vmatprep.subr.mxu0 0.0
          %279 = vmatpush1.msra.mxu0 0.0
          %280 = vmatprep.subr.mxu0 0.0
          %281 = vmatpush1.msra.mxu0 0.0
          %282 = vmatprep.subr.mxu0 0.0
          %283 = vmatpush1.msra.mxu0 0.0
          %284 = vmatprep.subr.mxu0 0.0
          %285 = vmatpush1.msra.mxu0 0.0
          %286 = vmatprep.subr.mxu0 0.0
          %287 = vmatpush1.msra.mxu0 0.0
          %288 = vmatprep.subr.mxu0 0.0
          %289 = vmatpush1.msra.mxu0 0.0
          %290 = vmatprep.subr.mxu0 0.0
          %291 = vmatpush1.msra.mxu0 0.0
          %292 = vmatprep.subr.mxu0 0.0
          %293 = vmatpush1.msra.mxu0 0.0
          %294 = vmatprep.subr.mxu0 0.0
          %295 = vmatpush1.msra.mxu0 0.0
          %296 = vmatprep.subr.mxu0 0.0
          %297 = vmatpush1.msra.mxu0 0.0
          %298 = vmatprep.subr.mxu0 0.0
          %299 = vmatpush1.msra.mxu0 0.0
          %300 = vmatprep.subr.mxu0 0.0
          %301 = vmatpush1.msra.mxu0 0.0
          %302 = vmatprep.subr.mxu0 0.0
          %303 = vmatpush1.msra.mxu0 0.0
          %304 = vmatprep.subr.mxu0 0.0
          %305 = vmatpush1.msra.mxu0 0.0
          %306 = vmatprep.subr.mxu0 0.0
          %307 = vmatpush1.msra.mxu0 0.0
          %308 = vmatprep.subr.mxu0 0.0
          %309 = vmatpush1.msra.mxu0 0.0
          %310 = vmatprep.subr.mxu0 0.0
          %311 = vmatpush1.msra.mxu0 0.0
          %312 = vmatprep.subr.mxu0 0.0
          %313 = vmatpush1.msra.mxu0 0.0
          %314 = vmatprep.subr.mxu0 0.0
          %315 = vmatpush1.msra.mxu0 0.0
          %316 = vmatprep.subr.mxu0 0.0
          %317 = vmatpush1.msra.mxu0 0.0
          %318 = vmatprep.subr.mxu0 0.0
          %319 = vmatpush1.msra.mxu0 0.0
          %320 = vmatprep.subr.mxu0 0.0
          %321 = vmatpush1.msra.mxu0 0.0
          %322 = vmatprep.subr.mxu0 0.0
          %323 = vmatpush1.msra.mxu0 0.0
          %324 = vmatprep.subr.mxu0 0.0
          %325 = vmatpush1.msra.mxu0 0.0
          %326 = vmatprep.subr.mxu0 0.0
          %327 = vmatpush1.msra.mxu0 0.0
          %328 = vmatprep.subr.mxu0 0.0
          %329 = vmatpush1.msra.mxu0 0.0
          %330 = vmatprep.subr.mxu0 0.0
          %331 = vmatpush1.msra.mxu0 0.0
          %332 = vmatprep.subr.mxu0 0.0
          %333 = vmatpush1.msra.mxu0 0.0
          %334 = vmatprep.mubr.f32.mxu0 0.0
          %335 = vmatmul.mubr.f32.gmra.mrb[0].mxu0 %v268
          %v336 = vpop.f32.mrb[0].mxu0
          %v337 = vadd.f32 0.0, %v336
          %v338 = vpop.f32.mrb[0].mxu0
          %339 = vdwg.mxu0
          %v340 = vadd.f32 %v264, %v337
          %vm341 = vcmask 258048
          %342 = vst.msk [vmem:[#allocation2] sm:$0x1f] %vm341, %v340
        $region52: #{tpu_custom_call.1} parent=43 // pred_fallthru
          _
        %p343 = scmp.eq.s32.totalorder %s18, 3
        // Predicated region
        $region53: #{tpu_custom_call.1} parent=43 // pred_check
          %p344 = pneg %p343
        $region54: #{tpu_custom_call.1} parent=43 // pred_check_branch
          %346 = sbr.rel (%p344) target = $region56
        $region55: #{tpu_custom_call.1} parent=43 // pred_region
          %s347 = smul.u32 %s18, 8
          %v348 = vlaneseq
          %v349 = vand.u32 %v348, 127
          %v350 = vstv %s347
          %v351 = vadd.s32 %v350, %v349
          %352 = vset.pattern.permute.xlu0 0
          %353 = vperm.xlu0 %352, %v241
          %v354 = vpop.permute.xlu0 %353
          %vm355 = vcmp.ge.s32.totalorder %v351, %v354
          %356 = vset.pattern.permute.xlu0 0
          %357 = vperm.xlu0 %356, %v243
          %v358 = vpop.permute.xlu0 %357
          %vm359 = vcmp.lt.s32.totalorder %v351, %v358
          %vm360 = vmand %vm355, %vm359
          %v361 = vsel %vm360, 1, 0
          %v362 = vcvt.s32.f32 %v361
          %v363 = vld [vmem:[#allocation2] sm:$0x1f]
          %v364 = vld [vmem:[%s234] sm:$0x7]
          %vm365 = vcmask 23552
          %v367 = vsel %vm365, %v362, 0
          %vm369 = vcmask 1042432
          %v371 = vsel %vm369, %v364, 0
          %373 = vmatprep.subr.mxu0 0.0
          %374 = vmatpush1.msra.mxu0 %v371
          %375 = vmatprep.subr.mxu0 0.0
          %376 = vmatpush1.msra.mxu0 0.0
          %377 = vmatprep.subr.mxu0 0.0
          %378 = vmatpush1.msra.mxu0 0.0
          %379 = vmatprep.subr.mxu0 0.0
          %380 = vmatpush1.msra.mxu0 0.0
          %381 = vmatprep.subr.mxu0 0.0
          %382 = vmatpush1.msra.mxu0 0.0
          %383 = vmatprep.subr.mxu0 0.0
          %384 = vmatpush1.msra.mxu0 0.0
          %385 = vmatprep.subr.mxu0 0.0
          %386 = vmatpush1.msra.mxu0 0.0
          %387 = vmatprep.subr.mxu0 0.0
          %388 = vmatpush1.msra.mxu0 0.0
          %389 = vmatprep.subr.mxu0 0.0
          %390 = vmatpush1.msra.mxu0 0.0
          %391 = vmatprep.subr.mxu0 0.0
          %392 = vmatpush1.msra.mxu0 0.0
          %393 = vmatprep.subr.mxu0 0.0
          %394 = vmatpush1.msra.mxu0 0.0
          %395 = vmatprep.subr.mxu0 0.0
          %396 = vmatpush1.msra.mxu0 0.0
          %397 = vmatprep.subr.mxu0 0.0
          %398 = vmatpush1.msra.mxu0 0.0
          %399 = vmatprep.subr.mxu0 0.0
          %400 = vmatpush1.msra.mxu0 0.0
          %401 = vmatprep.subr.mxu0 0.0
          %402 = vmatpush1.msra.mxu0 0.0
          %403 = vmatprep.subr.mxu0 0.0
          %404 = vmatpush1.msra.mxu0 0.0
          %405 = vmatprep.subr.mxu0 0.0
          %406 = vmatpush1.msra.mxu0 0.0
          %407 = vmatprep.subr.mxu0 0.0
          %408 = vmatpush1.msra.mxu0 0.0
          %409 = vmatprep.subr.mxu0 0.0
          %410 = vmatpush1.msra.mxu0 0.0
          %411 = vmatprep.subr.mxu0 0.0
          %412 = vmatpush1.msra.mxu0 0.0
          %413 = vmatprep.subr.mxu0 0.0
          %414 = vmatpush1.msra.mxu0 0.0
          %415 = vmatprep.subr.mxu0 0.0
          %416 = vmatpush1.msra.mxu0 0.0
          %417 = vmatprep.subr.mxu0 0.0
          %418 = vmatpush1.msra.mxu0 0.0
          %419 = vmatprep.subr.mxu0 0.0
          %420 = vmatpush1.msra.mxu0 0.0
          %421 = vmatprep.subr.mxu0 0.0
          %422 = vmatpush1.msra.mxu0 0.0
          %423 = vmatprep.subr.mxu0 0.0
          %424 = vmatpush1.msra.mxu0 0.0
          %425 = vmatprep.subr.mxu0 0.0
          %426 = vmatpush1.msra.mxu0 0.0
          %427 = vmatprep.subr.mxu0 0.0
          %428 = vmatpush1.msra.mxu0 0.0
          %429 = vmatprep.subr.mxu0 0.0
          %430 = vmatpush1.msra.mxu0 0.0
          %431 = vmatprep.subr.mxu0 0.0
          %432 = vmatpush1.msra.mxu0 0.0
          %433 = vmatprep.subr.mxu0 0.0
          %434 = vmatpush1.msra.mxu0 0.0
          %435 = vmatprep.subr.mxu0 0.0
          %436 = vmatpush1.msra.mxu0 0.0
          %437 = vmatprep.mubr.f32.mxu0 0.0
          %438 = vmatmul.mubr.f32.gmra.mrb[0].mxu0 %v367
          %v439 = vpop.f32.mrb[0].mxu0
          %v440 = vadd.f32 0.0, %v439
          %v441 = vpop.f32.mrb[0].mxu0
          %442 = vdwg.mxu0
          %v443 = vadd.f32 %v363, %v440
          %vm444 = vcmask 258048
          %445 = vst.msk [vmem:[#allocation2] sm:$0x1f] %vm444, %v443
          %v446 = vld [vmem:[%s2] sm:$0x1f]
          %v447 = vcvt.s32.f32 %v446
          %vm448 = vcmp.gt.f32.partialorder %v447, 0.0
          %v449 = vmax.f32 %v447, 1.0
          %v450 = vrcp.pop %v449
          %v451 = vmul.f32 1.0, %v450
          %v452 = vsel %vm448, %v451, 0.0
          %v453 = vld [vmem:[#allocation2] sm:$0x1f]
          %455 = vset.pattern.permute.xlu0 0
          %456 = vperm.xlu0 %455, %v452
          %v457 = vpop.permute.xlu0 %456
          %v459 = vmul.f32 %v453, %v457
          %v460 = vld [vmem:[%s4] sm:$0xff]
          %v461 = vld [vmem:[%s4 + $0x8] sm:$0xff]
          %v462 = vld [vmem:[%s4 + $0x10] sm:$0xff]
          %v463 = vld [vmem:[%s4 + $0x18] sm:$0xff]
          %v464 = vld [vmem:[%s4 + $0x20] sm:$0xff]
          %v465 = vld [vmem:[%s4 + $0x28] sm:$0xff]
          %v466 = vld [vmem:[%s4 + $0x30] sm:$0xff]
          %v467 = vld [vmem:[%s4 + $0x38] sm:$0xff]
          %v468 = vld [vmem:[%s3] sm:$0x1f]
          %vm469 = vcmask 261120
          %v471 = vsel %vm469, %v468, 0
          %473 = vmatprep.subr.mxu0 0.0
          %474 = vmatpush1.msra.mxu0 %v464
          %475 = vmatprep.subr.mxu0 0.0
          %476 = vmatpush1.msra.mxu0 %v465
          %477 = vmatprep.subr.mxu0 0.0
          %478 = vmatpush1.msra.mxu0 %v466
          %479 = vmatprep.subr.mxu0 0.0
          %480 = vmatpush1.msra.mxu0 %v467
          %481 = vmatprep.subr.mxu0 0.0
          %482 = vmatpush1.msra.mxu0 0.0
          %483 = vmatprep.subr.mxu0 0.0
          %484 = vmatpush1.msra.mxu0 0.0
          %485 = vmatprep.subr.mxu0 0.0
          %486 = vmatpush1.msra.mxu0 0.0
          %487 = vmatprep.subr.mxu0 0.0
          %488 = vmatpush1.msra.mxu0 0.0
          %489 = vmatprep.subr.mxu0 0.0
          %490 = vmatpush1.msra.mxu0 0.0
          %491 = vmatprep.subr.mxu0 0.0
          %492 = vmatpush1.msra.mxu0 0.0
          %493 = vmatprep.subr.mxu0 0.0
          %494 = vmatpush1.msra.mxu0 0.0
          %495 = vmatprep.subr.mxu0 0.0
          %496 = vmatpush1.msra.mxu0 0.0
          %497 = vmatprep.subr.mxu0 0.0
          %498 = vmatpush1.msra.mxu0 0.0
          %499 = vmatprep.subr.mxu0 0.0
          %500 = vmatpush1.msra.mxu0 0.0
          %501 = vmatprep.subr.mxu0 0.0
          %502 = vmatpush1.msra.mxu0 0.0
          %503 = vmatprep.subr.mxu0 0.0
          %504 = vmatpush1.msra.mxu0 0.0
          %505 = vmatprep.subr.mxu0 0.0
          %506 = vmatpush1.msra.mxu0 0.0
          %507 = vmatprep.subr.mxu0 0.0
          %508 = vmatpush1.msra.mxu0 0.0
          %509 = vmatprep.subr.mxu0 0.0
          %510 = vmatpush1.msra.mxu0 0.0
          %511 = vmatprep.subr.mxu0 0.0
          %512 = vmatpush1.msra.mxu0 0.0
          %513 = vmatprep.subr.mxu0 0.0
          %514 = vmatpush1.msra.mxu0 0.0
          %515 = vmatprep.subr.mxu0 0.0
          %516 = vmatpush1.msra.mxu0 0.0
          %517 = vmatprep.subr.mxu0 0.0
          %518 = vmatpush1.msra.mxu0 0.0
          %519 = vmatprep.subr.mxu0 0.0
          %520 = vmatpush1.msra.mxu0 0.0
          %521 = vmatprep.subr.mxu0 0.0
          %522 = vmatpush1.msra.mxu0 0.0
          %523 = vmatprep.subr.mxu0 0.0
          %524 = vmatpush1.msra.mxu0 0.0
          %525 = vmatprep.subr.mxu0 0.0
          %526 = vmatpush1.msra.mxu0 0.0
          %527 = vmatprep.subr.mxu0 0.0
          %528 = vmatpush1.msra.mxu0 0.0
          %529 = vmatprep.subr.mxu0 0.0
          %530 = vmatpush1.msra.mxu0 0.0
          %531 = vmatprep.subr.mxu0 0.0
          %532 = vmatpush1.msra.mxu0 0.0
          %533 = vmatprep.subr.mxu0 0.0
          %534 = vmatpush1.msra.mxu0 0.0
          %535 = vmatprep.subr.mxu0 0.0
          %536 = vmatpush1.msra.mxu0 0.0
          %537 = vmatprep.mubr.f32.mxu0 0.0
          %538 = vmatmul.mubr.f32.gmra.mrb[0].mxu0 %v471
          %v539 = vpop.f32.mrb[0].mxu0
          %v540 = vadd.f32 0.0, %v539
          %v541 = vpop.f32.mrb[0].mxu0
          %542 = vdwg.mxu0
          %v544 = vsel %vm469, %v459, 0
          %546 = vmatprep.subr.mxu0 0.0
          %547 = vmatpush1.msra.mxu0 %v460
          %548 = vmatprep.subr.mxu0 0.0
          %549 = vmatpush1.msra.mxu0 %v461
          %550 = vmatprep.subr.mxu0 0.0
          %551 = vmatpush1.msra.mxu0 %v462
          %552 = vmatprep.subr.mxu0 0.0
          %553 = vmatpush1.msra.mxu0 %v463
          %554 = vmatprep.subr.mxu0 0.0
          %555 = vmatpush1.msra.mxu0 0.0
          %556 = vmatprep.subr.mxu0 0.0
          %557 = vmatpush1.msra.mxu0 0.0
          %558 = vmatprep.subr.mxu0 0.0
          %559 = vmatpush1.msra.mxu0 0.0
          %560 = vmatprep.subr.mxu0 0.0
          %561 = vmatpush1.msra.mxu0 0.0
          %562 = vmatprep.subr.mxu0 0.0
          %563 = vmatpush1.msra.mxu0 0.0
          %564 = vmatprep.subr.mxu0 0.0
          %565 = vmatpush1.msra.mxu0 0.0
          %566 = vmatprep.subr.mxu0 0.0
          %567 = vmatpush1.msra.mxu0 0.0
          %568 = vmatprep.subr.mxu0 0.0
          %569 = vmatpush1.msra.mxu0 0.0
          %570 = vmatprep.subr.mxu0 0.0
          %571 = vmatpush1.msra.mxu0 0.0
          %572 = vmatprep.subr.mxu0 0.0
          %573 = vmatpush1.msra.mxu0 0.0
          %574 = vmatprep.subr.mxu0 0.0
          %575 = vmatpush1.msra.mxu0 0.0
          %576 = vmatprep.subr.mxu0 0.0
          %577 = vmatpush1.msra.mxu0 0.0
          %578 = vmatprep.subr.mxu0 0.0
          %579 = vmatpush1.msra.mxu0 0.0
          %580 = vmatprep.subr.mxu0 0.0
          %581 = vmatpush1.msra.mxu0 0.0
          %582 = vmatprep.subr.mxu0 0.0
          %583 = vmatpush1.msra.mxu0 0.0
          %584 = vmatprep.subr.mxu0 0.0
          %585 = vmatpush1.msra.mxu0 0.0
          %586 = vmatprep.subr.mxu0 0.0
          %587 = vmatpush1.msra.mxu0 0.0
          %588 = vmatprep.subr.mxu0 0.0
          %589 = vmatpush1.msra.mxu0 0.0
          %590 = vmatprep.subr.mxu0 0.0
          %591 = vmatpush1.msra.mxu0 0.0
          %592 = vmatprep.subr.mxu0 0.0
          %593 = vmatpush1.msra.mxu0 0.0
          %594 = vmatprep.subr.mxu0 0.0
          %595 = vmatpush1.msra.mxu0 0.0
          %596 = vmatprep.subr.mxu0 0.0
          %597 = vmatpush1.msra.mxu0 0.0
          %598 = vmatprep.subr.mxu0 0.0
          %599 = vmatpush1.msra.mxu0 0.0
          %600 = vmatprep.subr.mxu0 0.0
          %601 = vmatpush1.msra.mxu0 0.0
          %602 = vmatprep.subr.mxu0 0.0
          %603 = vmatpush1.msra.mxu0 0.0
          %604 = vmatprep.subr.mxu0 0.0
          %605 = vmatpush1.msra.mxu0 0.0
          %606 = vmatprep.subr.mxu0 0.0
          %607 = vmatpush1.msra.mxu0 0.0
          %608 = vmatprep.subr.mxu0 0.0
          %609 = vmatpush1.msra.mxu0 0.0
          %610 = vmatprep.mubr.f32.mxu0 0.0
          %611 = vmatmul.mubr.f32.gmra.mrb[0].mxu0 %v544
          %v612 = vpop.f32.mrb[0].mxu0
          %v613 = vadd.f32 %v540, %v612
          %v614 = vpop.f32.mrb[0].mxu0
          %615 = vdwg.mxu0
          %v616 = vld [vmem:[%s5] sm:$0x1]
          %v618 = vlaneseq
          %v619 = vshrl.u32 %v618, 7
          %v620 = vsub.s32 0, %v619
          %v621 = vrot.slane %v616, %v620
          %v623 = vadd.f32 %v613, %v621
          %vm624 = vcmask 45056
          %625 = vst.msk [vmem:[#allocation3] sm:$0x1f] %vm624, %v623
        $region56: #{tpu_custom_call.1} parent=43 // pred_fallthru
          _
        // Predicated region
        $region57: #{tpu_custom_call.1} parent=43 // pred_check
          %p626 = pneg %p162
        $region58: #{tpu_custom_call.1} parent=43 // pred_check_branch
          %628 = sbr.rel (%p626) target = $region60
        $region59: #{tpu_custom_call.1} parent=43 // pred_region
          %s630 = ssub.s32 128, 128
          %631 = vsyncadd [#allocation4], %s630
          %s633 = sshll.u32 [#allocation3], 4
          %s634 = int_to_ptr.vmem [resolvable:$true] %s633
          %636 = dma.vmem_to_hbm [thread:$0]  %s634, 128, %s6, [#allocation4]
        $region60: #{tpu_custom_call.1} parent=43 // pred_fallthru
          _
        // Predicated region
        $region61: #{tpu_custom_call.1} parent=43 // pred_check
          %p637 = pneg %p162
        $region62: #{tpu_custom_call.1} parent=43 // pred_check_branch
          %639 = sbr.rel (%p637) target = $region64
        $region63: #{tpu_custom_call.1} parent=43 // pred_region
          %640 = dma.done [#allocation4], 128
        $region64: #{tpu_custom_call.1} parent=43 // pred_fallthru
          _
      $region44: #{tpu_custom_call.1} parent=5 // pred_fallthru
        _
      %p641 = scmp.le.s32.totalorder 2, %s13
      // Predicated region
      $region65: #{tpu_custom_call.1} parent=5 // pred_check
        %p642 = pneg %p641
      $region66: #{tpu_custom_call.1} parent=5 // pred_check_branch
        %644 = sbr.rel (%p642) target = $region68
      $region67: #{tpu_custom_call.1} parent=5 // pred_region
        %s645 = ssub.s32 %s13, 2
      $region68: #{tpu_custom_call.1} parent=5 // pred_fallthru
        _
    $region6: #{tpu_custom_call.1} parent=1 // loop_footer
      %s17 = sadd.s32 1, %s13
    $region7: #{tpu_custom_call.1} parent=1 // loop_footer_branch
      %12 = sbr.rel target = $region3
    $region8: #{tpu_custom_call.1} parent=1 // loop_exit
      _
    %646 = vsyncpa [#allocation4], 1
    %s647 = scalar_lea.sflag [#allocation4], 1
    %648 = vsyncpa %s647, 1

</llo_original>
